<compile_context>
chip_gen: v5e
topology: v5e:2x2
jax: 0.10.0
libtpu: 0.0.40
codegen_flags: <defaults>
</compile_context>

<pallas_src>
import jax
import jax.numpy as jnp
from jax import lax
from jax.experimental import pallas as pl
from jax.experimental.pallas import tpu as pltpu

EPS = 1e-8        # matches the reference torch eps
COV_EPS = 1e-6    # diagonal-covariance floor (standard DAGMM regularisation)


def make_dagmm_kernel(d_in_pad, w_pad, batch, tile_b):
    """Kernel closure over static segment offsets / batch size / tile size."""
    x_lo = 0
    r_lo = d_in_pad
    w_lo = 2 * d_in_pad

    def kernel(pk_ref, we_ref, be_ref, wd_ref, bd_ref,
               ge_ref, gw_ref, sc_ref, energy_ref):
        f32 = jnp.float32

        # --- compressor.encode(x): one bf16 dot, feature-major --------------
        xb = pk_ref[x_lo:x_lo + d_in_pad, :]                       # bf16 [D, TB]
        enc = jnp.tanh(
            jnp.dot(we_ref[...], xb, preferred_element_type=f32)
            + be_ref[...])                                          # f32 [L, TB]

        # --- compressor.decode(encoded): enc stays f32 ----------------------
        dec = jnp.dot(wd_ref[...], enc, preferred_element_type=f32) \
            + bd_ref[...]                                           # f32 [D, TB]

        # --- relative euclidean distance (cosine_similarity is overwritten
        #     by `cosine_sim = relative_ed.view(-1,1)` in the reference, so it
        #     is never used and is not computed here). -----------------------
        rec = pk_ref[r_lo:r_lo + d_in_pad, :].astype(f32)           # [D, TB]
        diff = rec - dec
        num2 = jnp.sum(diff * diff, axis=0, keepdims=True)          # [1, TB]
        den2 = jnp.sum(rec * rec, axis=0, keepdims=True)            # [1, TB]
        rel = jnp.sqrt(num2) * lax.rsqrt(jnp.maximum(den2, EPS * EPS))

        # mask padded batch columns -> rel_ed = 0 on pad lanes (keeps the GMM
        # terms well away from f32 range on pad columns)
        col = (pl.program_id(0) * tile_b
               + lax.broadcasted_iota(jnp.int32, (1, tile_b), 1))
        rel = jnp.where(col < batch, rel, 0.0)                      # [1, TB]

        win = pk_ref[w_lo:w_lo + w_pad, :].astype(f32)              # [W, TB]

        # --- GMM sample energy.  latent z = [enc | rel | rel | win] is never
        #     materialised.  log_prob_k = -0.5*sum z^2/var + sum z*mu/var + c_k
        #     is evaluated with two stacked matmuls:
        #       ge = [-0.5*iv_enc | mu*iv_enc]  (K, 2L)
        #       gw = [-0.5*iv_win | mu*iv_win]  (K, 2W)
        #     and VPU terms for the two (identical) scalar latent slots. ------
        a_enc = jnp.concatenate([enc * enc, enc], axis=0)           # [2L, TB]
        a_win = jnp.concatenate([win * win, win], axis=0)           # [2W, TB]
        lp = (jnp.dot(ge_ref[...], a_enc, preferred_element_type=f32)
              + jnp.dot(gw_ref[...], a_win, preferred_element_type=f32)
              + sc_ref[:, 0:1] * (rel * rel)      # -0.5 * iv_scalar-slots
              + sc_ref[:, 1:2] * rel              # mu*iv scalar-slots
              + sc_ref[:, 2:3])                   # per-mixture constant
        # lp: [K, TB]

        # --- energy = -logsumexp over mixtures (sublane reduction) ----------
        m = jnp.max(lp, axis=0, keepdims=True)                      # [1, TB]
        lse = m + jnp.log(jnp.sum(jnp.exp(lp - m), axis=0, keepdims=True))
        energy_ref[...] = -lse                                      # [1, TB]

    return kernel


def dagmm_forward(x_cat, x_cont, rec_data, winners, params, *, tile_b=8192):
    """Eval-mode SOM-DAGMM forward: per-sample GMM energy, shape [B]."""
    b, d_cat = x_cat.shape
    d_cont = x_cont.shape[1]
    d_in = d_cat + d_cont
    w = winners.shape[1]

    we, be, wd, bd = params["we"], params["be"], params["wd"], params["bd"]
    phi, mu, var = params["phi"], params["mu"], params["var"]
    l = we.shape[1]
    k = mu.shape[0]

    def rpad16(n):
        return ((n + 15) // 16) * 16

    d_in_pad = rpad16(d_in)
    w_pad = rpad16(w)
    d_pack = 2 * d_in_pad + w_pad

    # ---- hoist all batch-independent GMM math out of the kernel -------------
    var_f = (var + COV_EPS).astype(jnp.float32)
    inv_var = 1.0 / var_f                                             # [K, Lz]
    miv = mu.astype(jnp.float32) * inv_var                            # [K, Lz]
    log_det = jnp.sum(jnp.log(2.0 * jnp.pi * var_f), axis=1)          # [K]
    c_k = (-0.5 * jnp.sum(mu * miv, axis=1) - 0.5 * log_det
           + jnp.log(phi[0]))                                         # [K]
    # latent column layout: [enc (L) | rel_ed | cos_sim(=rel_ed) | winners (W)]
    iv_enc, miv_enc = inv_var[:, :l], miv[:, :l]                      # [K, L]
    iv_win, miv_win = inv_var[:, l + 2:], miv[:, l + 2:]              # [K, W]
    iv_sc = jnp.sum(inv_var[:, l:l + 2], axis=1)                      # [K]
    miv_sc = jnp.sum(miv[:, l:l + 2], axis=1)                         # [K]

    ge = jnp.concatenate([-0.5 * iv_enc, miv_enc], axis=1).astype(jnp.float32)
    gw = jnp.concatenate(
        [jnp.pad(-0.5 * iv_win, ((0, 0), (0, w_pad - w))),
         jnp.pad(miv_win, ((0, 0), (0, w_pad - w)))],
        axis=1).astype(jnp.float32)                                   # [K, 2Wp]
    sc = jnp.stack([-0.5 * iv_sc, miv_sc, c_k], axis=1).astype(jnp.float32)

    # ---- encoder / decoder weights, feature-major, row-padded ---------------
    we_t = jnp.pad(we.T, ((0, 0), (0, d_in_pad - d_in))).astype(jnp.bfloat16)
    be_col = be.reshape(l, 1).astype(jnp.float32)
    wd_t = jnp.pad(wd.T, ((0, d_in_pad - d_in), (0, 0))).astype(jnp.float32)
    bd_col = jnp.pad(bd.reshape(d_in, 1),
                     ((0, d_in_pad - d_in), (0, 0))).astype(jnp.float32)

    # ---- batch tiling: multiple of 128; >=2 grid steps when possible --------
    tile_b = max(128, (tile_b // 128) * 128)
    half = max(128, pl.cdiv(pl.cdiv(b, 2), 128) * 128)
    tile_b = min(tile_b, half)
    bp = pl.cdiv(b, tile_b) * tile_b
    grid = (bp // tile_b,)

    # ---- single packed bf16 feature-major stream: [x | rec | winners] -------
    def seg(a, rows):
        at = a.T.astype(jnp.bfloat16)                                 # [d, b]
        return jnp.pad(at, ((0, rows - a.shape[1]), (0, bp - b)))

    x_full = jnp.concatenate([x_cat, x_cont], axis=1)                 # [b, Din]
    packed = jnp.concatenate(
        [seg(x_full, d_in_pad), seg(rec_data, d_in_pad), seg(winners, w_pad)],
        axis=0)                                                       # [Dp, bp]

    def resident(a):
        return pl.BlockSpec(a.shape, lambda i: (0, 0))

    cost = pl.CostEstimate(
        flops=int(bp * (4 * d_in_pad * l + 4 * l * k + 4 * w_pad * k
                        + 8 * d_in_pad + 12 * k + 12)),
        transcendentals=int(bp * (l + k + 4)),
        bytes_accessed=int(bp * (2 * d_pack + 4)))

    kernel = make_dagmm_kernel(d_in_pad, w_pad, b, tile_b)

    energy_row = pl.pallas_call(
        kernel,
        out_shape=jax.ShapeDtypeStruct((1, bp), jnp.float32),
        grid=grid,
        in_specs=[pl.BlockSpec((d_pack, tile_b), lambda i: (0, i)),
                  resident(we_t), resident(be_col),
                  resident(wd_t), resident(bd_col),
                  resident(ge), resident(gw), resident(sc)],
        out_specs=pl.BlockSpec((1, tile_b), lambda i: (0, i)),
        compiler_params=pltpu.CompilerParams(
            dimension_semantics=("parallel",)),
        cost_estimate=cost,
    )(packed, we_t, be_col, wd_t, bd_col, ge, gw, sc)

    return energy_row[0, :b]


def dagmm_reference(x_cat, x_cont, rec_data, winners, params):
    """Pure-JAX reference of the same forward (correctness check)."""
    x = jnp.concatenate([x_cat, x_cont], axis=1)
    enc = jnp.tanh(x @ params["we"] + params["be"])
    dec = enc @ params["wd"] + params["bd"]
    num = jnp.linalg.norm(rec_data - dec, axis=1, keepdims=True)
    den = jnp.linalg.norm(rec_data, axis=1, keepdims=True)
    rel_ed = num / jnp.maximum(den, EPS)
    cos_sim = rel_ed        # reference bug reproduced: cosine_sim = relative_ed
    z = jnp.concatenate([enc, rel_ed, cos_sim, winners], axis=1)
    var = params["var"] + COV_EPS
    d = z[:, None, :] - params["mu"][None, :, :]
    maha = jnp.sum(d * d / var[None, :, :], axis=-1)
    log_det = jnp.sum(jnp.log(2.0 * jnp.pi * var), axis=1)
    log_prob = -0.5 * (maha + log_det[None, :]) + jnp.log(params["phi"])
    m = jnp.max(log_prob, axis=1, keepdims=True)
    lse = m + jnp.log(jnp.sum(jnp.exp(log_prob - m), axis=1, keepdims=True))
    return -lse[:, 0]


def init_params(key, d_in, d_latent, d_win, n_mix):
    lz = d_latent + 2 + d_win
    k_we, k_wd, k_mu, k_var = jax.random.split(key, 4)
    return {
        "we": jax.random.normal(k_we, (d_in, d_latent), jnp.float32) * 0.1,
        "be": jnp.zeros((1, d_latent), jnp.float32),
        "wd": jax.random.normal(k_wd, (d_latent, d_in), jnp.float32) * 0.1,
        "bd": jnp.zeros((1, d_in), jnp.float32),
        "phi": jnp.full((1, n_mix), 1.0 / n_mix, jnp.float32),
        "mu": jax.random.normal(k_mu, (n_mix, lz), jnp.float32) * 0.5,
        "var": 0.5 + jax.random.uniform(k_var, (n_mix, lz), jnp.float32),
    }


if __name__ == "__main__":
    B, D_CAT, D_CONT, D_LATENT, D_WIN, N_MIX = 512, 6, 10, 4, 2, 4
    D_IN = D_CAT + D_CONT

    key = jax.random.PRNGKey(0)
    k1, k2, k3, k4, kp = jax.random.split(key, 5)
    x_cat = jax.random.normal(k1, (B, D_CAT), jnp.float32)
    x_cont = jax.random.normal(k2, (B, D_CONT), jnp.float32)
    rec_data = jax.random.normal(k3, (B, D_IN), jnp.float32)
    winners = jax.random.uniform(k4, (B, D_WIN), jnp.float32)
    params = init_params(kp, D_IN, D_LATENT, D_WIN, N_MIX)

    # default tile_b=8192 is clamped to 256 here -> a 2-step (pipelined) grid,
    # which also exercises the v7x dual-core "parallel" path.
    energy = dagmm_forward(x_cat, x_cont, rec_data, winners, params)
    jax.block_until_ready(energy)
    assert energy.shape == (B,)
    assert bool(jnp.all(jnp.isfinite(energy)))

    # compare against pure-JAX reference on bf16-rounded inputs / encoder
    # weight (the kernel streams activations and the encoder weight in bf16;
    # decoder weight and all GMM math stay f32).
    q = lambda a: a.astype(jnp.bfloat16).astype(jnp.float32)
    ref_params = dict(params, we=q(params["we"]))
    ref = dagmm_reference(q(x_cat), q(x_cont), q(rec_data), q(winners),
                          ref_params)
    assert jnp.allclose(energy, ref, rtol=5e-2, atol=1e-1), (
        float(jnp.max(jnp.abs(energy - ref))))

    print("KERNEL_OK")
</pallas_src>

<mosaic_0001>
module attributes {stable_mosaic.version = 11 : i64} {
  func.func @kernel(%arg0: i32, %arg1: memref<48x256xbf16, #tpu.memory_space<vmem>>, %arg2: memref<4x16xbf16, #tpu.memory_space<vmem>>, %arg3: memref<4x1xf32, #tpu.memory_space<vmem>>, %arg4: memref<16x4xf32, #tpu.memory_space<vmem>>, %arg5: memref<16x1xf32, #tpu.memory_space<vmem>>, %arg6: memref<4x8xf32, #tpu.memory_space<vmem>>, %arg7: memref<4x32xf32, #tpu.memory_space<vmem>>, %arg8: memref<4x3xf32, #tpu.memory_space<vmem>>, %arg9: memref<1x256xf32, #tpu.memory_space<vmem>>) attributes {dimension_semantics = [#tpu.dimension_semantics<parallel>], iteration_bounds = array<i64: 2>, scalar_prefetch = 0 : i64, scratch_operands = 0 : i64, tpu.core_type = #tpu.core_type<tc>, window_params = [{transform_indices = @transform_0, window_bounds = array<i64: 48, 256>}, {pipeline_mode = #tpu.pipeline_mode<synchronous>, transform_indices = @transform_1, window_bounds = array<i64: 4, 16>}, {pipeline_mode = #tpu.pipeline_mode<synchronous>, transform_indices = @transform_2, window_bounds = array<i64: 4, 1>}, {pipeline_mode = #tpu.pipeline_mode<synchronous>, transform_indices = @transform_3, window_bounds = array<i64: 16, 4>}, {pipeline_mode = #tpu.pipeline_mode<synchronous>, transform_indices = @transform_4, window_bounds = array<i64: 16, 1>}, {pipeline_mode = #tpu.pipeline_mode<synchronous>, transform_indices = @transform_5, window_bounds = array<i64: 4, 8>}, {pipeline_mode = #tpu.pipeline_mode<synchronous>, transform_indices = @transform_6, window_bounds = array<i64: 4, 32>}, {pipeline_mode = #tpu.pipeline_mode<synchronous>, transform_indices = @transform_7, window_bounds = array<i64: 4, 3>}, {transform_indices = @transform_8, window_bounds = array<i64: 1, 256>}]} {
    %c0 = arith.constant 0 : index
    %c0_0 = arith.constant 0 : index
    %0 = vector.load %arg1[%c0, %c0_0] : memref<48x256xbf16, #tpu.memory_space<vmem>>, vector<16x256xbf16>
    %c0_1 = arith.constant 0 : index
    %c0_2 = arith.constant 0 : index
    %1 = vector.load %arg2[%c0_1, %c0_2] : memref<4x16xbf16, #tpu.memory_space<vmem>>, vector<4x16xbf16>
    %cst = arith.constant dense<0.000000e+00> : vector<4x256xf32>
    %2 = tpu.matmul %1, %0, %cst {dimension_numbers = #tpu.dot_dimension_numbers<[1], [0], [0], [1], [0, 0, 1, 1], [], []>} : vector<4x16xbf16>, vector<16x256xbf16>, vector<4x256xf32> -> vector<4x256xf32>
    %c0_3 = arith.constant 0 : index
    %c0_4 = arith.constant 0 : index
    %3 = vector.load %arg3[%c0_3, %c0_4] : memref<4x1xf32, #tpu.memory_space<vmem>>, vector<4x1xf32>
    %4 = vector.broadcast %3 : vector<4x1xf32> to vector<4x256xf32>
    %5 = arith.addf %2, %4 : vector<4x256xf32>
    %6 = math.tanh %5 : vector<4x256xf32>
    %c0_5 = arith.constant 0 : index
    %c0_6 = arith.constant 0 : index
    %7 = vector.load %arg4[%c0_5, %c0_6] : memref<16x4xf32, #tpu.memory_space<vmem>>, vector<16x4xf32>
    %cst_7 = arith.constant dense<0.000000e+00> : vector<16x256xf32>
    %8 = tpu.matmul %7, %6, %cst_7 {dimension_numbers = #tpu.dot_dimension_numbers<[1], [0], [0], [1], [0, 0, 1, 1], [], []>} : vector<16x4xf32>, vector<4x256xf32>, vector<16x256xf32> -> vector<16x256xf32>
    %c0_8 = arith.constant 0 : index
    %c0_9 = arith.constant 0 : index
    %9 = vector.load %arg5[%c0_8, %c0_9] : memref<16x1xf32, #tpu.memory_space<vmem>>, vector<16x1xf32>
    %10 = vector.broadcast %9 : vector<16x1xf32> to vector<16x256xf32>
    %11 = arith.addf %8, %10 : vector<16x256xf32>
    %c16 = arith.constant 16 : index
    %c0_10 = arith.constant 0 : index
    %12 = vector.load %arg1[%c16, %c0_10] : memref<48x256xbf16, #tpu.memory_space<vmem>>, vector<16x256xbf16>
    %13 = arith.extf %12 : vector<16x256xbf16> to vector<16x256xf32>
    %14 = arith.subf %13, %11 : vector<16x256xf32>
    %15 = arith.mulf %14, %14 : vector<16x256xf32>
    %cst_11 = arith.constant dense<0.000000e+00> : vector<256xf32>
    %16 = vector.multi_reduction <add>, %15, %cst_11 [0] : vector<16x256xf32> to vector<256xf32>
    %17 = vector.shape_cast %16 : vector<256xf32> to vector<1x256xf32>
    %18 = arith.mulf %13, %13 : vector<16x256xf32>
    %cst_12 = arith.constant dense<0.000000e+00> : vector<256xf32>
    %19 = vector.multi_reduction <add>, %18, %cst_12 [0] : vector<16x256xf32> to vector<256xf32>
    %20 = vector.shape_cast %19 : vector<256xf32> to vector<1x256xf32>
    %21 = math.sqrt %17 : vector<1x256xf32>
    %cst_13 = arith.constant 1.000000e-16 : f32
    %22 = vector.broadcast %cst_13 : f32 to vector<1x256xf32>
    %23 = arith.maximumf %20, %22 : vector<1x256xf32>
    %24 = math.rsqrt %23 : vector<1x256xf32>
    %25 = arith.mulf %21, %24 : vector<1x256xf32>
    %c256_i32 = arith.constant 256 : i32
    %26 = arith.muli %arg0, %c256_i32 : i32
    %27 = tpu.iota {dimensions = array<i32: 1>} : vector<1x256xi32>
    %28 = vector.broadcast %26 : i32 to vector<1x256xi32>
    %29 = arith.addi %28, %27 : vector<1x256xi32>
    %c512_i32 = arith.constant 512 : i32
    %30 = vector.broadcast %c512_i32 : i32 to vector<1x256xi32>
    %31 = arith.cmpi slt, %29, %30 : vector<1x256xi32>
    %cst_14 = arith.constant 0.000000e+00 : f32
    %32 = vector.broadcast %cst_14 : f32 to vector<1x256xf32>
    %33 = arith.select %31, %25, %32 : vector<1x256xi1>, vector<1x256xf32>
    %c32 = arith.constant 32 : index
    %c0_15 = arith.constant 0 : index
    %34 = vector.load %arg1[%c32, %c0_15] : memref<48x256xbf16, #tpu.memory_space<vmem>>, vector<16x256xbf16>
    %35 = arith.extf %34 : vector<16x256xbf16> to vector<16x256xf32>
    %36 = arith.mulf %6, %6 : vector<4x256xf32>
    %37 = tpu.concatenate %36, %6 in 0 : vector<4x256xf32>, vector<4x256xf32> -> vector<8x256xf32>
    %38 = arith.mulf %35, %35 : vector<16x256xf32>
    %39 = tpu.concatenate %38, %35 in 0 : vector<16x256xf32>, vector<16x256xf32> -> vector<32x256xf32>
    %c0_16 = arith.constant 0 : index
    %c0_17 = arith.constant 0 : index
    %40 = vector.load %arg6[%c0_16, %c0_17] : memref<4x8xf32, #tpu.memory_space<vmem>>, vector<4x8xf32>
    %cst_18 = arith.constant dense<0.000000e+00> : vector<4x256xf32>
    %41 = tpu.matmul %40, %37, %cst_18 {dimension_numbers = #tpu.dot_dimension_numbers<[1], [0], [0], [1], [0, 0, 1, 1], [], []>} : vector<4x8xf32>, vector<8x256xf32>, vector<4x256xf32> -> vector<4x256xf32>
    %c0_19 = arith.constant 0 : index
    %c0_20 = arith.constant 0 : index
    %42 = vector.load %arg7[%c0_19, %c0_20] : memref<4x32xf32, #tpu.memory_space<vmem>>, vector<4x32xf32>
    %cst_21 = arith.constant dense<0.000000e+00> : vector<4x256xf32>
    %43 = tpu.matmul %42, %39, %cst_21 {dimension_numbers = #tpu.dot_dimension_numbers<[1], [0], [0], [1], [0, 0, 1, 1], [], []>} : vector<4x32xf32>, vector<32x256xf32>, vector<4x256xf32> -> vector<4x256xf32>
    %44 = arith.addf %41, %43 : vector<4x256xf32>
    %c0_22 = arith.constant 0 : index
    %c0_23 = arith.constant 0 : index
    %45 = vector.load %arg8[%c0_22, %c0_23] : memref<4x3xf32, #tpu.memory_space<vmem>>, vector<4x1xf32>
    %46 = arith.mulf %33, %33 : vector<1x256xf32>
    %47 = vector.broadcast %45 : vector<4x1xf32> to vector<4x256xf32>
    %48 = vector.broadcast %46 : vector<1x256xf32> to vector<4x256xf32>
    %49 = arith.mulf %47, %48 : vector<4x256xf32>
    %50 = arith.addf %44, %49 : vector<4x256xf32>
    %c0_24 = arith.constant 0 : index
    %c1 = arith.constant 1 : index
    %51 = vector.load %arg8[%c0_24, %c1] : memref<4x3xf32, #tpu.memory_space<vmem>>, vector<4x1xf32>
    %52 = vector.broadcast %51 : vector<4x1xf32> to vector<4x256xf32>
    %53 = vector.broadcast %33 : vector<1x256xf32> to vector<4x256xf32>
    %54 = arith.mulf %52, %53 : vector<4x256xf32>
    %55 = arith.addf %50, %54 : vector<4x256xf32>
    %c0_25 = arith.constant 0 : index
    %c2 = arith.constant 2 : index
    %56 = vector.load %arg8[%c0_25, %c2] : memref<4x3xf32, #tpu.memory_space<vmem>>, vector<4x1xf32>
    %57 = vector.broadcast %56 : vector<4x1xf32> to vector<4x256xf32>
    %58 = arith.addf %55, %57 : vector<4x256xf32>
    %cst_26 = arith.constant dense<0xFF800000> : vector<256xf32>
    %59 = vector.multi_reduction <maximumf>, %58, %cst_26 [0] : vector<4x256xf32> to vector<256xf32>
    %60 = vector.shape_cast %59 : vector<256xf32> to vector<1x256xf32>
    %61 = vector.broadcast %60 : vector<1x256xf32> to vector<4x256xf32>
    %62 = arith.subf %58, %61 : vector<4x256xf32>
    %63 = math.exp %62 : vector<4x256xf32>
    %cst_27 = arith.constant dense<0.000000e+00> : vector<256xf32>
    %64 = vector.multi_reduction <add>, %63, %cst_27 [0] : vector<4x256xf32> to vector<256xf32>
    %65 = vector.shape_cast %64 : vector<256xf32> to vector<1x256xf32>
    %66 = math.log %65 : vector<1x256xf32>
    %67 = arith.addf %60, %66 : vector<1x256xf32>
    %cst_28 = arith.constant 0.000000e+00 : f32
    %68 = vector.broadcast %cst_28 : f32 to vector<1x256xf32>
    %69 = arith.subf %68, %67 : vector<1x256xf32>
    %c0_29 = arith.constant 0 : index
    %c0_30 = arith.constant 0 : index
    %70 = vector.load %arg9[%c0_29, %c0_30] : memref<1x256xf32, #tpu.memory_space<vmem>>, vector<1x256xf32>
    tpu.vector_store %arg9[%c0_29, %c0_30], %69 {strides = array<i32>} : memref<1x256xf32, #tpu.memory_space<vmem>>, vector<1x256xf32>,
    return
  }
  func.func @transform_0(%arg0: i32) -> (i32, i32) {
    %c0_i32 = arith.constant 0 : i32
    %c0_i32_0 = arith.constant 0 : i32
    return %c0_i32, %arg0 : i32, i32
  }
  func.func @transform_1(%arg0: i32) -> (i32, i32) {
    %c0_i32 = arith.constant 0 : i32
    %c0_i32_0 = arith.constant 0 : i32
    %c0_i32_1 = arith.constant 0 : i32
    return %c0_i32, %c0_i32_0 : i32, i32
  }
  func.func @transform_2(%arg0: i32) -> (i32, i32) {
    %c0_i32 = arith.constant 0 : i32
    %c0_i32_0 = arith.constant 0 : i32
    %c0_i32_1 = arith.constant 0 : i32
    return %c0_i32, %c0_i32_0 : i32, i32
  }
  func.func @transform_3(%arg0: i32) -> (i32, i32) {
    %c0_i32 = arith.constant 0 : i32
    %c0_i32_0 = arith.constant 0 : i32
    %c0_i32_1 = arith.constant 0 : i32
    return %c0_i32, %c0_i32_0 : i32, i32
  }
  func.func @transform_4(%arg0: i32) -> (i32, i32) {
    %c0_i32 = arith.constant 0 : i32
    %c0_i32_0 = arith.constant 0 : i32
    %c0_i32_1 = arith.constant 0 : i32
    return %c0_i32, %c0_i32_0 : i32, i32
  }
  func.func @transform_5(%arg0: i32) -> (i32, i32) {
    %c0_i32 = arith.constant 0 : i32
    %c0_i32_0 = arith.constant 0 : i32
    %c0_i32_1 = arith.constant 0 : i32
    return %c0_i32, %c0_i32_0 : i32, i32
  }
  func.func @transform_6(%arg0: i32) -> (i32, i32) {
    %c0_i32 = arith.constant 0 : i32
    %c0_i32_0 = arith.constant 0 : i32
    %c0_i32_1 = arith.constant 0 : i32
    return %c0_i32, %c0_i32_0 : i32, i32
  }
  func.func @transform_7(%arg0: i32) -> (i32, i32) {
    %c0_i32 = arith.constant 0 : i32
    %c0_i32_0 = arith.constant 0 : i32
    %c0_i32_1 = arith.constant 0 : i32
    return %c0_i32, %c0_i32_0 : i32, i32
  }
  func.func @transform_8(%arg0: i32) -> (i32, i32) {
    %c0_i32 = arith.constant 0 : i32
    %c0_i32_0 = arith.constant 0 : i32
    return %c0_i32, %arg0 : i32, i32
  }
}

</mosaic_0001>

<llo_original>
// kernel: tpu_custom_call.1
$region0: #{tpu_custom_call.1}
  #allocation0 [shape = 'u32[]', space=smem, size = 0x4, offset = 0x4, fixed_abs, tag = 'smem constant byte address 0x4 - core index']
  #allocation1 [shape = 'u32[72,128]{1,0:T(1,128)}', space=vmem, size = 0x9000, scoped, tag = 'internal scratch']
  %s0 = inlined_call_operand.hbm [shape: bf16[48,512], index: 0, kind: input, shape index: {}]
  %s1 = inlined_call_operand.vmem [shape: bf16[4,16], index: 1, kind: input, shape index: {}]
  %s2 = inlined_call_operand.vmem [shape: f32[4,1], index: 2, kind: input, shape index: {}]
  %s3 = inlined_call_operand.vmem [shape: f32[16,4], index: 3, kind: input, shape index: {}]
  %s4 = inlined_call_operand.vmem [shape: f32[16,1], index: 4, kind: input, shape index: {}]
  %s5 = inlined_call_operand.vmem [shape: f32[4,8], index: 5, kind: input, shape index: {}]
  %s6 = inlined_call_operand.vmem [shape: f32[4,32], index: 6, kind: input, shape index: {}]
  %s7 = inlined_call_operand.vmem [shape: f32[4,3], index: 7, kind: input, shape index: {}]
  %s8 = inlined_call_operand.hbm [shape: f32[1,512], index: 8, kind: output, shape index: {}]
  %s9 = sld [smem:[#allocation0]]
  $region69: #{tpu_custom_call.1} parent=0
    _
  %s11 = ssub.s32 1, %s9
  %s12 = scalar_select 0, %s11, %s9
  $region1: #{tpu_custom_call.1} parent=0
    #allocation2 [shape = 'u8[49152]{0}', space=vmem, size = 0xc000, scoped, tag = 'input window, operand 0']
    #allocation3 [shape = 's32[2]{0}', space=sflag, size = 0x8, scoped, tag = 'scoped memory for tpu_custom_call.1']
    #allocation4 [shape = 's32[2]{0}', space=sflag, size = 0x8, scoped, tag = 'scoped memory for tpu_custom_call.1']
    #allocation5 [shape = 'u8[2048]{0}', space=vmem, size = 0x800, scoped, tag = 'output window, operand 0']
    %13 = vsyncpa [#allocation3], 0
    %s14 = scalar_lea.sflag [#allocation3], 1
    %15 = vsyncpa %s14, 0
    %16 = vsyncpa [#allocation4], 0
    %s17 = scalar_lea.sflag [#allocation4], 1
    %18 = vsyncpa %s17, 0
    loop: start=0, step=1, limit=4
    $region2: #{tpu_custom_call.1} parent=1 // loop_pre_header
      _
    $region3: #{tpu_custom_call.1} parent=1 // loop_header
      %s20 = sphi 0, %s24
      %p21 = scmp.ge.s32.totalorder %s20, 4
      %s30 = sphi 0, %s32
      %s33 = sphi 0, %s30
      %s34 = sphi 0, %s33
      %s50 = sphi 0, %s34
      %s54 = sphi 0, %s54
      %s56 = sphi 0, %s54
      %s57 = sphi 0, %s56
      %s71 = sphi 0, %s57
      %s75 = sphi 0, %s75
      %s77 = sphi 0, %s75
      %s78 = sphi 0, %s77
      %s92 = sphi 0, %s78
      %s96 = sphi 0, %s96
      %s98 = sphi 0, %s96
      %s99 = sphi 0, %s98
      %s113 = sphi 0, %s99
      %s117 = sphi 0, %s117
      %s119 = sphi 0, %s117
      %s120 = sphi 0, %s119
      %s134 = sphi 0, %s120
      %s138 = sphi 0, %s138
      %s140 = sphi 0, %s138
      %s141 = sphi 0, %s140
      %s155 = sphi 0, %s141
      %s159 = sphi 0, %s159
      %s161 = sphi 0, %s159
      %s162 = sphi 0, %s161
      %s176 = sphi 0, %s162
      %s180 = sphi 0, %s180
      %s182 = sphi 0, %s180
      %s183 = sphi 0, %s182
      %s197 = sphi 0, %s183
      %s203 = sphi 0, %s205
      %s206 = sphi 0, %s203
      %s207 = sphi 0, %s206
      %s223 = sphi 0, %s207
    $region4: #{tpu_custom_call.1} parent=1 // loop_header_branch
      %23 = sbr.rel (%p21) target = $region8
    $region5: #{tpu_custom_call.1} parent=1 // loop_body
      %s25 = ssub.s32 %s20, 1
      %s26 = ssub.s32 %s20, 2
      %s27 = sadd.s32 %s20, 1
      %s28 = ssub.s32 %s20, %s27
      %p29 = scmp.eq.s32.totalorder %s28, 0
      %s31 = sadd.s32 %s30, 1
      %s32 = scalar_select %p29, %s30, %s31
      %p35 = pneg %p29
      %p36 = scmp.eq.s32.totalorder %s20, 1
      %p37 = por %p35, %p36
      %p38 = scmp.ne.s32.totalorder %s30, %s33
      %p39 = scmp.eq.s32.totalorder %s20, 0
      %p40 = por %p38, %p39
      %p41 = scmp.ne.s32.totalorder %s30, %s33
      %p42 = scmp.eq.s32.totalorder %s25, 1
      %p43 = por %p41, %p42
      %p44 = scmp.ne.s32.totalorder %s33, %s34
      %p45 = scmp.eq.s32.totalorder %s25, 0
      %p46 = por %p44, %p45
      %p47 = scmp.ne.s32.totalorder %s33, %s34
      %p48 = scmp.eq.s32.totalorder %s26, 1
      %p49 = por %p47, %p48
      %p51 = scmp.ne.s32.totalorder %s34, %s50
      %p52 = scmp.eq.s32.totalorder %s26, 0
      %p53 = por %p51, %p52
      %s55 = sadd.s32 %s54, 1
      %p58 = scmp.eq.s32.totalorder %s20, 1
      %p59 = scmp.ne.s32.totalorder %s54, %s56
      %p60 = scmp.eq.s32.totalorder %s20, 0
      %p61 = por %p59, %p60
      %p62 = scmp.ne.s32.totalorder %s54, %s56
      %p63 = scmp.eq.s32.totalorder %s25, 1
      %p64 = por %p62, %p63
      %p65 = scmp.ne.s32.totalorder %s56, %s57
      %p66 = scmp.eq.s32.totalorder %s25, 0
      %p67 = por %p65, %p66
      %p68 = scmp.ne.s32.totalorder %s56, %s57
      %p69 = scmp.eq.s32.totalorder %s26, 1
      %p70 = por %p68, %p69
      %p72 = scmp.ne.s32.totalorder %s57, %s71
      %p73 = scmp.eq.s32.totalorder %s26, 0
      %p74 = por %p72, %p73
      %s76 = sadd.s32 %s75, 1
      %p79 = scmp.eq.s32.totalorder %s20, 1
      %p80 = scmp.ne.s32.totalorder %s75, %s77
      %p81 = scmp.eq.s32.totalorder %s20, 0
      %p82 = por %p80, %p81
      %p83 = scmp.ne.s32.totalorder %s75, %s77
      %p84 = scmp.eq.s32.totalorder %s25, 1
      %p85 = por %p83, %p84
      %p86 = scmp.ne.s32.totalorder %s77, %s78
      %p87 = scmp.eq.s32.totalorder %s25, 0
      %p88 = por %p86, %p87
      %p89 = scmp.ne.s32.totalorder %s77, %s78
      %p90 = scmp.eq.s32.totalorder %s26, 1
      %p91 = por %p89, %p90
      %p93 = scmp.ne.s32.totalorder %s78, %s92
      %p94 = scmp.eq.s32.totalorder %s26, 0
      %p95 = por %p93, %p94
      %s97 = sadd.s32 %s96, 1
      %p100 = scmp.eq.s32.totalorder %s20, 1
      %p101 = scmp.ne.s32.totalorder %s96, %s98
      %p102 = scmp.eq.s32.totalorder %s20, 0
      %p103 = por %p101, %p102
      %p104 = scmp.ne.s32.totalorder %s96, %s98
      %p105 = scmp.eq.s32.totalorder %s25, 1
      %p106 = por %p104, %p105
      %p107 = scmp.ne.s32.totalorder %s98, %s99
      %p108 = scmp.eq.s32.totalorder %s25, 0
      %p109 = por %p107, %p108
      %p110 = scmp.ne.s32.totalorder %s98, %s99
      %p111 = scmp.eq.s32.totalorder %s26, 1
      %p112 = por %p110, %p111
      %p114 = scmp.ne.s32.totalorder %s99, %s113
      %p115 = scmp.eq.s32.totalorder %s26, 0
      %p116 = por %p114, %p115
      %s118 = sadd.s32 %s117, 1
      %p121 = scmp.eq.s32.totalorder %s20, 1
      %p122 = scmp.ne.s32.totalorder %s117, %s119
      %p123 = scmp.eq.s32.totalorder %s20, 0
      %p124 = por %p122, %p123
      %p125 = scmp.ne.s32.totalorder %s117, %s119
      %p126 = scmp.eq.s32.totalorder %s25, 1
      %p127 = por %p125, %p126
      %p128 = scmp.ne.s32.totalorder %s119, %s120
      %p129 = scmp.eq.s32.totalorder %s25, 0
      %p130 = por %p128, %p129
      %p131 = scmp.ne.s32.totalorder %s119, %s120
      %p132 = scmp.eq.s32.totalorder %s26, 1
      %p133 = por %p131, %p132
      %p135 = scmp.ne.s32.totalorder %s120, %s134
      %p136 = scmp.eq.s32.totalorder %s26, 0
      %p137 = por %p135, %p136
      %s139 = sadd.s32 %s138, 1
      %p142 = scmp.eq.s32.totalorder %s20, 1
      %p143 = scmp.ne.s32.totalorder %s138, %s140
      %p144 = scmp.eq.s32.totalorder %s20, 0
      %p145 = por %p143, %p144
      %p146 = scmp.ne.s32.totalorder %s138, %s140
      %p147 = scmp.eq.s32.totalorder %s25, 1
      %p148 = por %p146, %p147
      %p149 = scmp.ne.s32.totalorder %s140, %s141
      %p150 = scmp.eq.s32.totalorder %s25, 0
      %p151 = por %p149, %p150
      %p152 = scmp.ne.s32.totalorder %s140, %s141
      %p153 = scmp.eq.s32.totalorder %s26, 1
      %p154 = por %p152, %p153
      %p156 = scmp.ne.s32.totalorder %s141, %s155
      %p157 = scmp.eq.s32.totalorder %s26, 0
      %p158 = por %p156, %p157
      %s160 = sadd.s32 %s159, 1
      %p163 = scmp.eq.s32.totalorder %s20, 1
      %p164 = scmp.ne.s32.totalorder %s159, %s161
      %p165 = scmp.eq.s32.totalorder %s20, 0
      %p166 = por %p164, %p165
      %p167 = scmp.ne.s32.totalorder %s159, %s161
      %p168 = scmp.eq.s32.totalorder %s25, 1
      %p169 = por %p167, %p168
      %p170 = scmp.ne.s32.totalorder %s161, %s162
      %p171 = scmp.eq.s32.totalorder %s25, 0
      %p172 = por %p170, %p171
      %p173 = scmp.ne.s32.totalorder %s161, %s162
      %p174 = scmp.eq.s32.totalorder %s26, 1
      %p175 = por %p173, %p174
      %p177 = scmp.ne.s32.totalorder %s162, %s176
      %p178 = scmp.eq.s32.totalorder %s26, 0
      %p179 = por %p177, %p178
      %s181 = sadd.s32 %s180, 1
      %p184 = scmp.eq.s32.totalorder %s20, 1
      %p185 = scmp.ne.s32.totalorder %s180, %s182
      %p186 = scmp.eq.s32.totalorder %s20, 0
      %p187 = por %p185, %p186
      %p188 = scmp.ne.s32.totalorder %s180, %s182
      %p189 = scmp.eq.s32.totalorder %s25, 1
      %p190 = por %p188, %p189
      %p191 = scmp.ne.s32.totalorder %s182, %s183
      %p192 = scmp.eq.s32.totalorder %s25, 0
      %p193 = por %p191, %p192
      %p194 = scmp.ne.s32.totalorder %s182, %s183
      %p195 = scmp.eq.s32.totalorder %s26, 1
      %p196 = por %p194, %p195
      %p198 = scmp.ne.s32.totalorder %s183, %s197
      %p199 = scmp.eq.s32.totalorder %s26, 0
      %p200 = por %p198, %p199
      %s201 = ssub.s32 %s20, %s27
      %p202 = scmp.eq.s32.totalorder %s201, 0
      %s204 = sadd.s32 %s203, 1
      %s205 = scalar_select %p202, %s203, %s204
      %p208 = pneg %p202
      %p209 = scmp.eq.s32.totalorder %s20, 1
      %p210 = por %p208, %p209
      %p211 = scmp.ne.s32.totalorder %s203, %s206
      %p212 = scmp.eq.s32.totalorder %s20, 0
      %p213 = por %p211, %p212
      %p214 = scmp.ne.s32.totalorder %s203, %s206
      %p215 = scmp.eq.s32.totalorder %s25, 1
      %p216 = por %p214, %p215
      %p217 = scmp.ne.s32.totalorder %s206, %s207
      %p218 = scmp.eq.s32.totalorder %s25, 0
      %p219 = por %p217, %p218
      %p220 = scmp.ne.s32.totalorder %s206, %s207
      %p221 = scmp.eq.s32.totalorder %s26, 1
      %p222 = por %p220, %p221
      %p224 = scmp.ne.s32.totalorder %s207, %s223
      %p225 = scmp.eq.s32.totalorder %s26, 0
      %p226 = por %p224, %p225
      %p227 = scmp.le.s32.totalorder 1, %s20
      %p228 = scmp.lt.s32.totalorder %s20, 3
      %p229 = pnand %p227, %p228
      %p230 = pneg %p229
      // Predicated region
      $region9: #{tpu_custom_call.1} parent=5 // pred_check
        _
      $region10: #{tpu_custom_call.1} parent=5 // pred_check_branch
        %232 = sbr.rel (%p229) target = $region12
      $region11: #{tpu_custom_call.1} parent=5 // pred_region
        %s233 = ssub.s32 %s20, 1
        // Predicated region
        $region13: #{tpu_custom_call.1} parent=11 // pred_check
          %p234 = pneg %p67
        $region14: #{tpu_custom_call.1} parent=11 // pred_check_branch
          %236 = sbr.rel (%p234) target = $region16
        $region15: #{tpu_custom_call.1} parent=11 // pred_region
          _
        $region16: #{tpu_custom_call.1} parent=11 // pred_fallthru
          _
        // Predicated region
        $region17: #{tpu_custom_call.1} parent=11 // pred_check
          %p237 = pneg %p88
        $region18: #{tpu_custom_call.1} parent=11 // pred_check_branch
          %239 = sbr.rel (%p237) target = $region20
        $region19: #{tpu_custom_call.1} parent=11 // pred_region
          _
        $region20: #{tpu_custom_call.1} parent=11 // pred_fallthru
          _
        // Predicated region
        $region21: #{tpu_custom_call.1} parent=11 // pred_check
          %p240 = pneg %p109
        $region22: #{tpu_custom_call.1} parent=11 // pred_check_branch
          %242 = sbr.rel (%p240) target = $region24
        $region23: #{tpu_custom_call.1} parent=11 // pred_region
          _
        $region24: #{tpu_custom_call.1} parent=11 // pred_fallthru
          _
        // Predicated region
        $region25: #{tpu_custom_call.1} parent=11 // pred_check
          %p243 = pneg %p130
        $region26: #{tpu_custom_call.1} parent=11 // pred_check_branch
          %245 = sbr.rel (%p243) target = $region28
        $region27: #{tpu_custom_call.1} parent=11 // pred_region
          _
        $region28: #{tpu_custom_call.1} parent=11 // pred_fallthru
          _
        // Predicated region
        $region29: #{tpu_custom_call.1} parent=11 // pred_check
          %p246 = pneg %p151
        $region30: #{tpu_custom_call.1} parent=11 // pred_check_branch
          %248 = sbr.rel (%p246) target = $region32
        $region31: #{tpu_custom_call.1} parent=11 // pred_region
          _
        $region32: #{tpu_custom_call.1} parent=11 // pred_fallthru
          _
        // Predicated region
        $region33: #{tpu_custom_call.1} parent=11 // pred_check
          %p249 = pneg %p172
        $region34: #{tpu_custom_call.1} parent=11 // pred_check_branch
          %251 = sbr.rel (%p249) target = $region36
        $region35: #{tpu_custom_call.1} parent=11 // pred_region
          _
        $region36: #{tpu_custom_call.1} parent=11 // pred_fallthru
          _
        // Predicated region
        $region37: #{tpu_custom_call.1} parent=11 // pred_check
          %p252 = pneg %p193
        $region38: #{tpu_custom_call.1} parent=11 // pred_check_branch
          %254 = sbr.rel (%p252) target = $region40
        $region39: #{tpu_custom_call.1} parent=11 // pred_region
          _
        $region40: #{tpu_custom_call.1} parent=11 // pred_fallthru
          _
      $region12: #{tpu_custom_call.1} parent=5 // pred_fallthru
        _
      %p255 = scmp.lt.s32.totalorder %s20, 2
      // Predicated region
      $region41: #{tpu_custom_call.1} parent=5 // pred_check
        %p256 = pneg %p255
      $region42: #{tpu_custom_call.1} parent=5 // pred_check_branch
        %258 = sbr.rel (%p256) target = $region44
      $region43: #{tpu_custom_call.1} parent=5 // pred_region
        // Predicated region
        $region45: #{tpu_custom_call.1} parent=43 // pred_check
          %p259 = pneg %p40
        $region46: #{tpu_custom_call.1} parent=43 // pred_check_branch
          %261 = sbr.rel (%p259) target = $region48
        $region47: #{tpu_custom_call.1} parent=43 // pred_region
          %s262 = sand.u32 %s30, 1
          %s263 = scalar_lea.sflag [#allocation3], %s262
          %s264 = sand.u32 %s30, 1
          %s265 = smul.addr %s264, 48
          %s266 = scalar_lea.vmem [#allocation2], %s265
          %s267 = smul.u32 2, %s20
          %269 = vsyncadd %s263, 0
          %s270 = smul.addr %s267, 4
          %s271 = scalar_lea.hbm %s0, %s270
          %s272 = sshll.u32 %s271, 4
          %s273 = int_to_ptr.hbm [resolvable:$true] %s272
          %s274 = sshll.u32 %s266, 4
          %s275 = int_to_ptr.vmem [resolvable:$true] %s274
          %280 = dma.hbm_to_vmem [thread:$0]  %s273, 768, %s275, %s263, 256, 128, 8
        $region48: #{tpu_custom_call.1} parent=43 // pred_fallthru
          _
      $region44: #{tpu_custom_call.1} parent=5 // pred_fallthru
        _
      %p281 = scmp.le.s32.totalorder 1, %s20
      %p282 = scmp.lt.s32.totalorder %s20, 3
      %p283 = pnand %p281, %p282
      %p284 = pneg %p283
      // Predicated region
      $region49: #{tpu_custom_call.1} parent=5 // pred_check
        _
      $region50: #{tpu_custom_call.1} parent=5 // pred_check_branch
        %286 = sbr.rel (%p283) target = $region52
      $region51: #{tpu_custom_call.1} parent=5 // pred_region
        %s287 = ssub.s32 %s20, 1
        %s288 = sand.u32 %s33, 1
        %s289 = scalar_lea.sflag [#allocation3], %s288
        %s290 = sand.u32 %s33, 1
        %s291 = smul.addr %s290, 48
        %s292 = scalar_lea.vmem [#allocation2], %s291
        // Predicated region
        $region53: #{tpu_custom_call.1} parent=51 // pred_check
          %p293 = pneg %p46
        $region54: #{tpu_custom_call.1} parent=51 // pred_check_branch
          %295 = sbr.rel (%p293) target = $region56
        $region55: #{tpu_custom_call.1} parent=51 // pred_region
          %297 = dma.done %s289, 768
        $region56: #{tpu_custom_call.1} parent=51 // pred_fallthru
          _
        %s298 = sand.u32 %s33, 1
        %s299 = scalar_lea.sflag [#allocation3], %s298
        %s300 = sand.u32 %s33, 1
        %s301 = smul.addr %s300, 48
        %s302 = scalar_lea.vmem [#allocation2], %s301
        %p303 = pneg %p46
        %p304 = pneg %p43
        %p305 = pneg %p67
        %p306 = pneg %p64
        %p307 = pneg %p88
        %p308 = pneg %p85
        %p309 = pneg %p109
        %p310 = pneg %p106
        %p311 = pneg %p130
        %p312 = pneg %p127
        %p313 = pneg %p151
        %p314 = pneg %p148
        %p315 = pneg %p172
        %p316 = pneg %p169
        %p317 = pneg %p193
        %p318 = pneg %p190
        %p319 = pneg %p219
        %p320 = pneg %p216
        %s321 = sand.u32 %s206, 1
        %s322 = scalar_lea.sflag [#allocation4], %s321
        %s323 = sand.u32 %s206, 1
        %s324 = smul.addr %s323, 2
        %s325 = scalar_lea.vmem [#allocation5], %s324
        %s326 = smul.u32 2, %s25
        %s327 = smul.u32 2, %s25
        %v329 = vld [vmem:[%s292] sm:$0xff]
        %v330 = vld [vmem:[%s292 + $0x8] sm:$0xff]
        %v331 = vld [vmem:[%s1] sm:$0x3]
        %v332 = vld [vmem:[%s2] sm:$0xf]
        %334 = vset.pattern.permute.xlu0 0
        %335 = vperm.xlu0 %334, %v332
        %v336 = vpop.permute.xlu0 %335
        %v340 = vunpack.c.l.b16 %v329
        %v341 = vunpack.c.h.b16 %v329
        %v342 = vunpack.c.l.b16 %v330
        %v343 = vunpack.c.h.b16 %v330
        %v344 = vpack.c.b16 %v342, %v340
        %v345 = vpack.c.b16 %v343, %v341
        %vm348 = vcmask 130048
        %v350 = vsel %vm348, %v331, 0
        %352 = vmatpush.bf16.msra.mxu0 0
        %353 = vmatpush.bf16.msra.mxu0 0
        %354 = vmatpush.bf16.msra.mxu0 0
        %355 = vmatpush.bf16.msra.mxu0 0
        %356 = vmatpush.bf16.msra.mxu0 0
        %357 = vmatpush.bf16.msra.mxu0 0
        %358 = vmatpush.bf16.msra.mxu0 0
        %359 = vmatpush.bf16.msra.mxu0 %v344
        %360 = vmatmul.bf16.gmra.mxu0 %v350
        %v361 = vpop.f32.mrf.mxu0
        %v362 = vadd.f32 %v336, %v361
        %v363 = vpop.f32.mrf.mxu0
        %364 = vdwg.mxu0
        %365 = vmatpush.bf16.msra.mxu0 0
        %366 = vmatpush.bf16.msra.mxu0 0
        %367 = vmatpush.bf16.msra.mxu0 0
        %368 = vmatpush.bf16.msra.mxu0 0
        %369 = vmatpush.bf16.msra.mxu0 0
        %370 = vmatpush.bf16.msra.mxu0 0
        %371 = vmatpush.bf16.msra.mxu0 0
        %372 = vmatpush.bf16.msra.mxu0 %v345
        %373 = vmatmul.bf16.gmra.mxu0 %v350
        %v374 = vpop.f32.mrf.mxu0
        %v375 = vadd.f32 %v336, %v374
        %v376 = vpop.f32.mrf.mxu0
        %377 = vdwg.mxu0
        %v378 = vtanh.pop %v362
        %v379 = vtanh.pop %v375
        %v380 = vld [vmem:[%s3] sm:$0xff]
        %v381 = vld [vmem:[%s3 + $0x8] sm:$0xff]
        %v382 = vld [vmem:[%s4] sm:$0xff]
        %v383 = vld [vmem:[%s4 + $0x8] sm:$0xff]
        %385 = vset.pattern.permute.xlu0 0
        %386 = vperm.xlu0 %385, %v382
        %v387 = vpop.permute.xlu0 %386
        %390 = vset.pattern.permute.xlu0 0
        %391 = vperm.xlu0 %390, %v383
        %v392 = vpop.permute.xlu0 %391
        %vm394 = vcmask 31744
        %v396 = vsel %vm394, %v380, 0
        %v399 = vsel %vm394, %v381, 0
        %vm401 = vcmask 1043456
        %v403 = vsel %vm401, %v378, 0
        %v406 = vsel %vm401, %v379, 0
        %408 = vmatpush.msra.mxu0 0.0
        %409 = vmatpush.msra.mxu0 0.0
        %410 = vmatpush.msra.mxu0 0.0
        %411 = vmatpush.msra.mxu0 0.0
        %412 = vmatpush.msra.mxu0 0.0
        %413 = vmatpush.msra.mxu0 0.0
        %414 = vmatpush.msra.mxu0 0.0
        %415 = vmatpush.msra.mxu0 0.0
        %416 = vmatpush.msra.mxu0 0.0
        %417 = vmatpush.msra.mxu0 0.0
        %418 = vmatpush.msra.mxu0 0.0
        %419 = vmatpush.msra.mxu0 0.0
        %420 = vmatpush.msra.mxu0 0.0
        %421 = vmatpush.msra.mxu0 0.0
        %422 = vmatpush.msra.mxu0 0.0
        %423 = vmatpush.msra.mxu0 %v403
        %424 = vmatmul.f32.gmra.mxu0 %v396
        %v425 = vpop.f32.mrf.mxu0
        %v426 = vadd.f32 %v387, %v425
        %427 = vmatmul.f32.gmra.mxu0 %v399
        %v428 = vpop.f32.mrf.mxu0
        %v429 = vadd.f32 %v392, %v428
        %430 = vdwg.mxu0
        %431 = vmatpush.msra.mxu0 0.0
        %432 = vmatpush.msra.mxu0 0.0
        %433 = vmatpush.msra.mxu0 0.0
        %434 = vmatpush.msra.mxu0 0.0
        %435 = vmatpush.msra.mxu0 0.0
        %436 = vmatpush.msra.mxu0 0.0
        %437 = vmatpush.msra.mxu0 0.0
        %438 = vmatpush.msra.mxu0 0.0
        %439 = vmatpush.msra.mxu0 0.0
        %440 = vmatpush.msra.mxu0 0.0
        %441 = vmatpush.msra.mxu0 0.0
        %442 = vmatpush.msra.mxu0 0.0
        %443 = vmatpush.msra.mxu0 0.0
        %444 = vmatpush.msra.mxu0 0.0
        %445 = vmatpush.msra.mxu0 0.0
        %446 = vmatpush.msra.mxu0 %v406
        %447 = vmatmul.f32.gmra.mxu0 %v396
        %v448 = vpop.f32.mrf.mxu0
        %v449 = vadd.f32 %v387, %v448
        %450 = vmatmul.f32.gmra.mxu0 %v399
        %v451 = vpop.f32.mrf.mxu0
        %v452 = vadd.f32 %v392, %v451
        %453 = vdwg.mxu0
        %v454 = vld [vmem:[%s292 + $0x10] sm:$0xff]
        %v455 = vld [vmem:[%s292 + $0x18] sm:$0xff]
        %v456 = vunpack.c.l.bf16 %v454
        %v457 = vunpack.c.h.bf16 %v454
        %v458 = vunpack.c.l.bf16 %v455
        %v459 = vunpack.c.h.bf16 %v455
        %v460 = vsub.f32 %v456, %v426
        %v461 = vsub.f32 %v457, %v449
        %v462 = vsub.f32 %v458, %v429
        %v463 = vsub.f32 %v459, %v452
        %v464 = vmul.f32 %v460, %v460
        %v465 = vmul.f32 %v461, %v461
        %v466 = vmul.f32 %v462, %v462
        %v467 = vmul.f32 %v463, %v463
        %v468 = vadd.f32 %v464, %v466
        %v469 = vrot.slane %v468, 4
        %v470 = vadd.f32 %v468, %v469
        %v471 = vrot.slane %v470, 2
        %v472 = vadd.f32 %v470, %v471
        %v473 = vrot.slane %v472, 1
        %v474 = vadd.f32 %v472, %v473
        %v475 = vadd.f32 %v465, %v467
        %v476 = vrot.slane %v475, 4
        %v477 = vadd.f32 %v475, %v476
        %v478 = vrot.slane %v477, 2
        %v479 = vadd.f32 %v477, %v478
        %v480 = vrot.slane %v479, 1
        %v481 = vadd.f32 %v479, %v480
        %v482 = vmul.f32 %v456, %v456
        %v483 = vmul.f32 %v457, %v457
        %v484 = vmul.f32 %v458, %v458
        %v485 = vmul.f32 %v459, %v459
        %v486 = vadd.f32 %v482, %v484
        %v487 = vrot.slane %v486, 4
        %v488 = vadd.f32 %v486, %v487
        %v489 = vrot.slane %v488, 2
        %v490 = vadd.f32 %v488, %v489
        %v491 = vrot.slane %v490, 1
        %v492 = vadd.f32 %v490, %v491
        %v493 = vadd.f32 %v483, %v485
        %v494 = vrot.slane %v493, 4
        %v495 = vadd.f32 %v493, %v494
        %v496 = vrot.slane %v495, 2
        %v497 = vadd.f32 %v495, %v496
        %v498 = vrot.slane %v497, 1
        %v499 = vadd.f32 %v497, %v498
        %v500 = vrsqrt.pop %v474
        %v501 = vmul.f32 %v500, %v474
        %v502 = vmul.f32 %v501, %v500
        %v503 = vmul.f32 0.5, %v502
        %v504 = vsub.f32 1.5, %v503
        %v505 = vmul.f32 %v500, %v504
        %v506 = vmul.f32 %v474, %v505
        %vm507 = vcmp.eq.f32.partialorder %v474, inf
        %v508 = vsel %vm507, %v474, %v506
        %vm509 = vcmp.eq.f32.partialorder %v474, 0.0
        %v510 = vand.u32 %v474, 2147483648
        %v511 = vsel %vm509, %v510, %v508
        %v512 = vrsqrt.pop %v481
        %v513 = vmul.f32 %v512, %v481
        %v514 = vmul.f32 %v513, %v512
        %v515 = vmul.f32 0.5, %v514
        %v516 = vsub.f32 1.5, %v515
        %v517 = vmul.f32 %v512, %v516
        %v518 = vmul.f32 %v481, %v517
        %vm519 = vcmp.eq.f32.partialorder %v481, inf
        %v520 = vsel %vm519, %v481, %v518
        %vm521 = vcmp.eq.f32.partialorder %v481, 0.0
        %v522 = vand.u32 %v481, 2147483648
        %v523 = vsel %vm521, %v522, %v520
        %v524 = vmax.f32 %v492, 1e-16
        %v525 = vmax.f32 %v499, 1e-16
        %v526 = vrsqrt.pop %v524
        %v527 = vmul.f32 %v526, %v524
        %v528 = vmul.f32 %v527, %v526
        %v529 = vmul.f32 0.5, %v528
        %v530 = vsub.f32 1.5, %v529
        %v531 = vmul.f32 %v526, %v530
        %vm532 = vweird.f32 %v524
        %vm533 = vweird.f32 %v526
        %vm534 = vmor %vm532, %vm533
        %v535 = vsel %vm534, %v526, %v531
        %v536 = vrsqrt.pop %v525
        %v537 = vmul.f32 %v536, %v525
        %v538 = vmul.f32 %v537, %v536
        %v539 = vmul.f32 0.5, %v538
        %v540 = vsub.f32 1.5, %v539
        %v541 = vmul.f32 %v536, %v540
        %vm542 = vweird.f32 %v525
        %vm543 = vweird.f32 %v536
        %vm544 = vmor %vm542, %vm543
        %v545 = vsel %vm544, %v536, %v541
        %v546 = vmul.f32 %v511, %v535
        %v547 = vmul.f32 %v523, %v545
        %s548 = smul.u32 %s25, 256
        %v549 = vlaneseq
        %v550 = vand.u32 %v549, 127
        %v551 = vadd.s32 %v550, 128
        %v552 = vstv %s548
        %v553 = vadd.s32 %v552, %v550
        %v554 = vadd.s32 %v552, %v551
        %vm555 = vcmp.lt.s32.totalorder %v553, 512
        %vm556 = vcmp.lt.s32.totalorder %v554, 512
        %v557 = vsel %vm555, %v546, 0.0
        %v558 = vsel %vm556, %v547, 0.0
        %v559 = vld [vmem:[%s292 + $0x20] sm:$0xff]
        %v560 = vld [vmem:[%s292 + $0x28] sm:$0xff]
        %v561 = vunpack.c.l.bf16 %v559
        %v562 = vunpack.c.h.bf16 %v559
        %v563 = vunpack.c.l.bf16 %v560
        %v564 = vunpack.c.h.bf16 %v560
        %v565 = vmul.f32 %v378, %v378
        %v566 = vmul.f32 %v379, %v379
        %v567 = vrot.slane %v378, 4
        %v568 = vrot.slane %v379, 4
        %v571 = vsel %vm401, %v565, %v567
        %v572 = vsel %vm401, %v566, %v568
        %v573 = vmul.f32 %v561, %v561
        %v574 = vmul.f32 %v562, %v562
        %v575 = vmul.f32 %v563, %v563
        %v576 = vmul.f32 %v564, %v564
        %v577 = vld [vmem:[%s5] sm:$0xf]
        %v578 = vld [vmem:[%s6] sm:$0xf]
        %vm579 = vcmask 261120
        %v581 = vsel %vm579, %v578, 0
        %583 = vmatpush.msra.mxu0 0.0
        %584 = vmatpush.msra.mxu0 0.0
        %585 = vmatpush.msra.mxu0 0.0
        %586 = vmatpush.msra.mxu0 0.0
        %587 = vmatpush.msra.mxu0 0.0
        %588 = vmatpush.msra.mxu0 0.0
        %589 = vmatpush.msra.mxu0 0.0
        %590 = vmatpush.msra.mxu0 0.0
        %591 = vmatpush.msra.mxu0 0.0
        %592 = vmatpush.msra.mxu0 0.0
        %593 = vmatpush.msra.mxu0 0.0
        %594 = vmatpush.msra.mxu0 0.0
        %595 = vmatpush.msra.mxu0 %v563
        %596 = vmatpush.msra.mxu0 %v561
        %597 = vmatpush.msra.mxu0 %v575
        %598 = vmatpush.msra.mxu0 %v573
        %599 = vmatmul.f32.gmra.mxu0 %v581
        %v600 = vpop.f32.mrf.mxu0
        %v601 = vadd.f32 0.0, %v600
        %602 = vdwg.mxu0
        %603 = vmatpush.msra.mxu0 0.0
        %604 = vmatpush.msra.mxu0 0.0
        %605 = vmatpush.msra.mxu0 0.0
        %606 = vmatpush.msra.mxu0 0.0
        %607 = vmatpush.msra.mxu0 0.0
        %608 = vmatpush.msra.mxu0 0.0
        %609 = vmatpush.msra.mxu0 0.0
        %610 = vmatpush.msra.mxu0 0.0
        %611 = vmatpush.msra.mxu0 0.0
        %612 = vmatpush.msra.mxu0 0.0
        %613 = vmatpush.msra.mxu0 0.0
        %614 = vmatpush.msra.mxu0 0.0
        %615 = vmatpush.msra.mxu0 %v564
        %616 = vmatpush.msra.mxu0 %v562
        %617 = vmatpush.msra.mxu0 %v576
        %618 = vmatpush.msra.mxu0 %v574
        %619 = vmatmul.f32.gmra.mxu0 %v581
        %v620 = vpop.f32.mrf.mxu0
        %v621 = vadd.f32 0.0, %v620
        %622 = vdwg.mxu0
        %vm623 = vcmask 64512
        %v625 = vsel %vm623, %v577, 0
        %627 = vmatpush.msra.mxu0 0.0
        %628 = vmatpush.msra.mxu0 0.0
        %629 = vmatpush.msra.mxu0 0.0
        %630 = vmatpush.msra.mxu0 0.0
        %631 = vmatpush.msra.mxu0 0.0
        %632 = vmatpush.msra.mxu0 0.0
        %633 = vmatpush.msra.mxu0 0.0
        %634 = vmatpush.msra.mxu0 0.0
        %635 = vmatpush.msra.mxu0 0.0
        %636 = vmatpush.msra.mxu0 0.0
        %637 = vmatpush.msra.mxu0 0.0
        %638 = vmatpush.msra.mxu0 0.0
        %639 = vmatpush.msra.mxu0 0.0
        %640 = vmatpush.msra.mxu0 0.0
        %641 = vmatpush.msra.mxu0 0.0
        %642 = vmatpush.msra.mxu0 %v571
        %643 = vmatmul.f32.gmra.mxu0 %v625
        %v644 = vpop.f32.mrf.mxu0
        %v645 = vadd.f32 %v601, %v644
        %646 = vdwg.mxu0
        %647 = vmatpush.msra.mxu0 0.0
        %648 = vmatpush.msra.mxu0 0.0
        %649 = vmatpush.msra.mxu0 0.0
        %650 = vmatpush.msra.mxu0 0.0
        %651 = vmatpush.msra.mxu0 0.0
        %652 = vmatpush.msra.mxu0 0.0
        %653 = vmatpush.msra.mxu0 0.0
        %654 = vmatpush.msra.mxu0 0.0
        %655 = vmatpush.msra.mxu0 0.0
        %656 = vmatpush.msra.mxu0 0.0
        %657 = vmatpush.msra.mxu0 0.0
        %658 = vmatpush.msra.mxu0 0.0
        %659 = vmatpush.msra.mxu0 0.0
        %660 = vmatpush.msra.mxu0 0.0
        %661 = vmatpush.msra.mxu0 0.0
        %662 = vmatpush.msra.mxu0 %v572
        %663 = vmatmul.f32.gmra.mxu0 %v625
        %v664 = vpop.f32.mrf.mxu0
        %v665 = vadd.f32 %v621, %v664
        %666 = vdwg.mxu0
        %v667 = vld [vmem:[%s7] sm:$0xf]
        %v668 = vmul.f32 %v557, %v557
        %v669 = vmul.f32 %v558, %v558
        %671 = vset.pattern.permute.xlu0 0
        %672 = vperm.xlu0 %671, %v667
        %v673 = vpop.permute.xlu0 %672
        %v675 = vmul.f32 %v673, %v668
        %v676 = vmul.f32 %v673, %v669
        %v677 = vadd.f32 %v645, %v675
        %v678 = vadd.f32 %v665, %v676
        %679 = vset.pattern.permute.xlu0 1
        %680 = vperm.xlu0 %679, %v667
        %v681 = vpop.permute.xlu0 %680
        %v683 = vmul.f32 %v681, %v557
        %v684 = vmul.f32 %v681, %v558
        %v685 = vadd.f32 %v677, %v683
        %v686 = vadd.f32 %v678, %v684
        %687 = vset.pattern.permute.xlu0 2
        %688 = vperm.xlu0 %687, %v667
        %v689 = vpop.permute.xlu0 %688
        %v691 = vadd.f32 %v685, %v689
        %v692 = vadd.f32 %v686, %v689
        %v693 = vsel %vm401, %v691, -inf
        %v694 = vrot.slane %v693, 4
        %v695 = vmax.f32 %v693, %v694
        %v696 = vrot.slane %v695, 2
        %v697 = vmax.f32 %v695, %v696
        %v698 = vrot.slane %v697, 1
        %v699 = vmax.f32 %v697, %v698
        %v700 = vsel %vm401, %v692, -inf
        %v701 = vrot.slane %v700, 4
        %v702 = vmax.f32 %v700, %v701
        %v703 = vrot.slane %v702, 2
        %v704 = vmax.f32 %v702, %v703
        %v705 = vrot.slane %v704, 1
        %v706 = vmax.f32 %v704, %v705
        %v707 = vsub.f32 %v691, %v699
        %v708 = vsub.f32 %v692, %v706
        %v709 = vmul.f32 %v707, 1.442695
        %v710 = vpow.pop %v709
        %v711 = vmul.f32 %v708, 1.442695
        %v712 = vpow.pop %v711
        %v713 = vsel %vm401, %v710, 0.0
        %v714 = vrot.slane %v713, 4
        %v715 = vadd.f32 %v713, %v714
        %v716 = vrot.slane %v715, 2
        %v717 = vadd.f32 %v715, %v716
        %v718 = vrot.slane %v717, 1
        %v719 = vadd.f32 %v717, %v718
        %v720 = vsel %vm401, %v712, 0.0
        %v721 = vrot.slane %v720, 4
        %v722 = vadd.f32 %v720, %v721
        %v723 = vrot.slane %v722, 2
        %v724 = vadd.f32 %v722, %v723
        %v725 = vrot.slane %v724, 1
        %v726 = vadd.f32 %v724, %v725
        %v727 = vlog2.pop %v719
        %v728 = vmul.f32 %v727, 0.6931472
        %v729 = vlog2.pop %v726
        %v730 = vmul.f32 %v729, 0.6931472
        %v731 = vadd.f32 %v699, %v728
        %v732 = vadd.f32 %v706, %v730
        %v733 = vsub.f32 0.0, %v731
        %v734 = vsub.f32 0.0, %v732
        %v737 = vrot.slane %v734, 7
        %vm738 = vcmask 1040384
        %v739 = vsel %vm738, %v733, %v737
        %v741 = vlaneseq
        %vm742 = vcmp.ge.s32.totalorder %v741, 0
        %vm743 = vcmp.lt.s32.totalorder %v741, 256
        %vm744 = vmand %vm742, %vm743
        %745 = vst.msk [vmem:[%s325] sm:$0x3] %vm744, %v739
        %s746 = sand.u32 %s206, 1
        %s747 = scalar_lea.sflag [#allocation4], %s746
        %s748 = sand.u32 %s206, 1
        %s749 = smul.addr %s748, 2
        %s750 = scalar_lea.vmem [#allocation5], %s749
        // Predicated region
        $region57: #{tpu_custom_call.1} parent=51 // pred_check
          %p751 = pneg %p216
        $region58: #{tpu_custom_call.1} parent=51 // pred_check_branch
          %753 = sbr.rel (%p751) target = $region60
        $region59: #{tpu_custom_call.1} parent=51 // pred_region
          %s754 = smul.u32 2, %s25
          %756 = vsyncadd %s747, 0
          %s757 = scalar_lea.hbm %s8, %s754
          %s759 = sshll.u32 %s750, 4
          %s760 = int_to_ptr.vmem [resolvable:$true] %s759
          %s761 = sshll.u32 %s757, 4
          %s762 = int_to_ptr.hbm [resolvable:$true] %s761
          %764 = dma.vmem_to_hbm [thread:$0]  %s760, 32, %s762, %s747
        $region60: #{tpu_custom_call.1} parent=51 // pred_fallthru
          _
      $region52: #{tpu_custom_call.1} parent=5 // pred_fallthru
        _
      %p765 = scmp.le.s32.totalorder 2, %s20
      // Predicated region
      $region61: #{tpu_custom_call.1} parent=5 // pred_check
        %p766 = pneg %p765
      $region62: #{tpu_custom_call.1} parent=5 // pred_check_branch
        %768 = sbr.rel (%p766) target = $region64
      $region63: #{tpu_custom_call.1} parent=5 // pred_region
        %s769 = ssub.s32 %s20, 2
        // Predicated region
        $region65: #{tpu_custom_call.1} parent=63 // pred_check
          %p770 = pneg %p222
        $region66: #{tpu_custom_call.1} parent=63 // pred_check_branch
          %772 = sbr.rel (%p770) target = $region68
        $region67: #{tpu_custom_call.1} parent=63 // pred_region
          %s773 = sand.u32 %s207, 1
          %s774 = scalar_lea.sflag [#allocation4], %s773
          %s775 = sand.u32 %s207, 1
          %s776 = smul.addr %s775, 2
          %s777 = scalar_lea.vmem [#allocation5], %s776
          %779 = dma.done %s774, 32
        $region68: #{tpu_custom_call.1} parent=63 // pred_fallthru
          _
      $region64: #{tpu_custom_call.1} parent=5 // pred_fallthru
        _
    $region6: #{tpu_custom_call.1} parent=1 // loop_footer
      %s24 = sadd.s32 1, %s20
    $region7: #{tpu_custom_call.1} parent=1 // loop_footer_branch
      %19 = sbr.rel target = $region3
    $region8: #{tpu_custom_call.1} parent=1 // loop_exit
      _
    %780 = vsyncpa [#allocation3], 1
    %s781 = scalar_lea.sflag [#allocation3], 1
    %782 = vsyncpa %s781, 1
    %783 = vsyncpa [#allocation4], 1
    %s784 = scalar_lea.sflag [#allocation4], 1
    %785 = vsyncpa %s784, 1

</llo_original>
